<compile_context>
chip_gen: v7x
topology: tpu7x:2x2x1
jax: 0.10.0
libtpu: 0.0.40
codegen_flags: <defaults>
</compile_context>

<pallas_src>
import functools

import jax
import jax.numpy as jnp
from jax.experimental import pallas as pl
from jax.experimental.pallas import tpu as pltpu


def _channel_attention_kernel(
    x_ref, w1t_ref, w2t_ref, o_ref, sum_ref, max_ref,
    *, hw, ts, need_mask, inv_hw,
):
    # x_ref  : (Bt, C, TS)  current batch-block x spatial-tile (native dtype)
    # w1t_ref: (C, Cr)      first 1x1 conv weight, pre-transposed
    # w2t_ref: (Cr, C)      second 1x1 conv weight, pre-transposed
    # o_ref  : (Bt, C)
    # sum_ref/max_ref: (Bt, C) f32 running spatial sum / max
    s = pl.program_id(1)
    n_s = pl.num_programs(1)

    @pl.when(s == 0)
    def _init():
        sum_ref[...] = jnp.zeros_like(sum_ref)
        max_ref[...] = jnp.full_like(max_ref, -jnp.inf)

    x = x_ref[...]                                    # (Bt, C, TS), native dtype

    def _accumulate(x_sum, x_max):
        # Accumulate sum directly in f32 (no full f32 copy of the slab);
        # max stays in native dtype until the tiny (Bt, C) result.
        sum_ref[...] += jnp.sum(x_sum, axis=-1, dtype=jnp.float32)
        max_ref[...] = jnp.maximum(
            max_ref[...], jnp.max(x_max, axis=-1).astype(jnp.float32)
        )

    if need_mask:
        # Only the last spatial tile can run past H*W: keep the hot loop
        # unmasked and pay the iota/compare/select only once per batch block.
        @pl.when(s < n_s - 1)
        def _fast():
            _accumulate(x, x)

        @pl.when(s == n_s - 1)
        def _masked():
            lane = jax.lax.broadcasted_iota(jnp.int32, x.shape, 2)
            valid = (s * ts + lane) < hw
            _accumulate(
                jnp.where(valid, x, jnp.zeros_like(x)),
                jnp.where(valid, x, jnp.full_like(x, -jnp.inf)),
            )
    else:
        _accumulate(x, x)

    @pl.when(s == n_s - 1)
    def _finalize():
        mean_p = sum_ref[...] * inv_hw                     # (Bt, C) f32
        max_p = max_ref[...]                               # (Bt, C) f32
        pooled = jnp.concatenate([mean_p, max_p], axis=0)  # (2*Bt, C)

        w1t = w1t_ref[...].astype(jnp.float32)             # (C, Cr)
        w2t = w2t_ref[...].astype(jnp.float32)             # (Cr, C)

        # fc = Conv1x1(C->Cr, no bias) -> ReLU -> Conv1x1(Cr->C, no bias)
        hidden = jnp.maximum(
            jnp.dot(pooled, w1t, preferred_element_type=jnp.float32), 0.0
        )                                                  # (2*Bt, Cr)
        out2 = jnp.dot(hidden, w2t, preferred_element_type=jnp.float32)

        bt = mean_p.shape[0]
        summed = out2[:bt] + out2[bt:]                     # fc(avg) + fc(max)
        o_ref[...] = jax.nn.sigmoid(summed).astype(o_ref.dtype)


def _device_kind():
    try:
        return jax.devices()[0].device_kind.lower()
    except Exception:
        return ""


def channel_attention(x, w1, w2, *, _max_block_bytes=None):
    """x: (B, C, H, W); w1: (C//r, C, 1, 1); w2: (C, C//r, 1, 1) -> (B, C, 1, 1).

    _max_block_bytes: test-only hook that caps the x-block size to force the
    multi-tile / masked code paths at small shapes.
    """
    B, C, H, W = x.shape
    HW = H * W
    Cr = w1.shape[0]

    # Lane-dense spatial layout (free reshape for contiguous NCHW).
    x3 = x.reshape(B, C, HW)
    # Pre-transpose the 1x1 conv weights once, outside the kernel.
    w1t = w1.reshape(Cr, C).T                              # (C, Cr)
    w2t = w2.reshape(C, Cr).T                              # (Cr, C)

    itemsize = jnp.dtype(x.dtype).itemsize
    w_itemsize = jnp.dtype(w1.dtype).itemsize

    # ---- generation-aware sizing -------------------------------------------
    kind = _device_kind()
    if "v7" in kind:
        # ~3.2 TB/s per-TC HBM: 8 MiB blocks amortize the ~0.35 us/step
        # overhead; double-buffered 16 MiB fits the 64 MiB physical VMEM.
        target_block_bytes, vmem_cap = 8 << 20, 56 << 20
    elif "v6" in kind:
        target_block_bytes, vmem_cap = 4 << 20, 100 << 20
    elif "v5" in kind:
        target_block_bytes, vmem_cap = 2 << 20, 100 << 20
    else:
        target_block_bytes, vmem_cap = 4 << 20, 48 << 20

    # ---- batch rows per grid step ------------------------------------------
    # The output block is (Bt, C); its second-to-last dim must be a multiple
    # of 8 or the full batch, so the legal choices are Bt == 8 or Bt == B.
    if B % 8 == 0 or B > 8:
        Bt = 8          # B > 8 and B % 8 != 0: cdiv grid, clamped last block.
    else:
        Bt = B          # full-dim block (always legal).

    # ---- spatial tile (lanes) ----------------------------------------------
    lane_bytes = Bt * C * itemsize                         # bytes per spatial lane
    # Fixed (non-x) VMEM: double-buffered weights + output block + f32 scratch.
    fixed_bytes = (
        2 * (C * Cr + Cr * C) * w_itemsize
        + 2 * Bt * C * itemsize
        + 2 * Bt * C * 4
    )
    # Largest x-block the VMEM budget allows (double-buffered), never below a
    # single minimal (Bt, C, 128) tile.
    x_cap = max((vmem_cap - fixed_bytes - (1 << 20)) // 2, lane_bytes * 128)
    # Prefer TS >= 512 lanes (>= 2 KiB contiguous per (b, c) row for f32) even
    # past the per-generation target, as long as the VMEM cap allows it.
    block_budget = min(max(target_block_bytes, lane_bytes * min(HW, 512)), x_cap)
    if _max_block_bytes is not None:
        block_budget = min(block_budget, _max_block_bytes)

    max_ts = max(block_budget // lane_bytes, 128)
    if HW <= max_ts:
        TS = HW                                            # one tile; full dim is legal
    else:
        TS = (max_ts // 128) * 128                         # multiple of 128 lanes
    n_spatial = pl.cdiv(HW, TS)
    need_mask = (HW % TS) != 0

    block_bytes = Bt * C * TS * itemsize
    vmem_limit = int(
        min(vmem_cap, max(2 * block_bytes + fixed_bytes + (2 << 20), 32 << 20))
    )

    kernel = functools.partial(
        _channel_attention_kernel,
        hw=HW, ts=TS, need_mask=need_mask, inv_hw=1.0 / HW,
    )

    out = pl.pallas_call(
        kernel,
        out_shape=jax.ShapeDtypeStruct((B, C), x.dtype),
        grid_spec=pltpu.PrefetchScalarGridSpec(
            num_scalar_prefetch=0,
            grid=(pl.cdiv(B, Bt), n_spatial),
            in_specs=[
                pl.BlockSpec((Bt, C, TS), lambda b, s: (b, 0, s)),
                pl.BlockSpec((C, Cr), lambda b, s: (0, 0)),
                pl.BlockSpec((Cr, C), lambda b, s: (0, 0)),
            ],
            out_specs=pl.BlockSpec((Bt, C), lambda b, s: (b, 0)),
            scratch_shapes=[
                pltpu.VMEM((Bt, C), jnp.float32),          # running sum
                pltpu.VMEM((Bt, C), jnp.float32),          # running max
            ],
        ),
        compiler_params=pltpu.CompilerParams(
            dimension_semantics=("parallel", "arbitrary"),
            vmem_limit_bytes=vmem_limit,
        ),
    )(x3, w1t, w2t)

    return out.reshape(B, C, 1, 1)


def _reference(x, w1, w2):
    """Pure-JAX reference mirroring the PyTorch forward."""
    w1_2d = w1.reshape(w1.shape[0], w1.shape[1])
    w2_2d = w2.reshape(w2.shape[0], w2.shape[1])
    avg_p = jnp.mean(x, axis=(2, 3))                       # (B, C)
    max_p = jnp.max(x, axis=(2, 3))                        # (B, C)

    def fc(p):
        h = jnp.maximum(p @ w1_2d.T, 0.0)
        return h @ w2_2d.T

    out = jax.nn.sigmoid(fc(avg_p) + fc(max_p))            # (B, C)
    return out.reshape(x.shape[0], x.shape[1], 1, 1)


def _run_case(key, B, C, H, W, ratio, max_block_bytes=None, tol=1e-5):
    Cr = max(C // ratio, 1)
    kx, k1, k2 = jax.random.split(key, 3)
    x = jax.random.normal(kx, (B, C, H, W), dtype=jnp.float32)
    w1 = jax.random.normal(k1, (Cr, C, 1, 1), dtype=jnp.float32) * 0.5
    w2 = jax.random.normal(k2, (C, Cr, 1, 1), dtype=jnp.float32) * 0.5

    y = channel_attention(x, w1, w2, _max_block_bytes=max_block_bytes)
    y = jax.block_until_ready(y)
    y_ref = _reference(x, w1, w2)

    assert y.shape == (B, C, 1, 1)
    err = jnp.max(jnp.abs(y - y_ref))
    assert jnp.allclose(y, y_ref, atol=tol, rtol=tol), (
        f"case B={B} C={C} H={H} W={W}: max abs err {err}"
    )


if __name__ == "__main__":
    key = jax.random.PRNGKey(0)
    k1, k2, k3 = jax.random.split(key, 3)

    # 1) Module-scale shapes: single spatial tile, Bt = B path.
    _run_case(k1, B=2, C=4, H=16, W=16, ratio=2)

    # 2) Multi batch blocks (Bt=8) + multi spatial tiles + OOB mask path
    #    (block cap forces TS=256 < HW=324, 324 % 256 != 0).
    _run_case(k2, B=16, C=8, H=18, W=18, ratio=2, max_block_bytes=64 * 1024)

    # 3) B > 8 with B % 8 != 0: cdiv batch grid with clamped partial last block.
    _run_case(k3, B=10, C=4, H=7, W=7, ratio=2)

    print("KERNEL_OK")
</pallas_src>

<mosaic_0001>
module attributes {stable_mosaic.version = 11 : i64} {
  func.func @_channel_attention_kernel(%arg0: i32, %arg1: i32, %arg2: memref<2x4x256xf32, #tpu.memory_space<vmem>>, %arg3: memref<4x2xf32, #tpu.memory_space<vmem>>, %arg4: memref<2x4xf32, #tpu.memory_space<vmem>>, %arg5: memref<2x4xf32, #tpu.memory_space<vmem>>, %arg6: memref<2x4xf32, #tpu.memory_space<vmem>>, %arg7: memref<2x4xf32, #tpu.memory_space<vmem>>) attributes {dimension_semantics = [#tpu.dimension_semantics<parallel>, #tpu.dimension_semantics<arbitrary>], iteration_bounds = array<i64: 1, 1>, scalar_prefetch = 0 : i64, scratch_operands = 2 : i64, tpu.core_type = #tpu.core_type<tc>, window_params = [{transform_indices = @transform_0, window_bounds = array<i64: 2, 4, 256>}, {pipeline_mode = #tpu.pipeline_mode<synchronous>, transform_indices = @transform_1, window_bounds = array<i64: 4, 2>}, {pipeline_mode = #tpu.pipeline_mode<synchronous>, transform_indices = @transform_2, window_bounds = array<i64: 2, 4>}, {transform_indices = @transform_3, window_bounds = array<i64: 2, 4>}]} {
    %c0_i32 = arith.constant 0 : i32
    %0 = arith.cmpi eq, %arg1, %c0_i32 : i32
    %1 = arith.extui %0 : i1 to i32
    %c0_i32_0 = arith.constant 0 : i32
    %2 = arith.cmpi ne, %1, %c0_i32_0 : i32
    scf.if %2 {
      %cst_14 = arith.constant 0.000000e+00 : f32
      %15 = vector.broadcast %cst_14 : f32 to vector<2x4xf32>
      %c0_15 = arith.constant 0 : index
      %c0_16 = arith.constant 0 : index
      %16 = vector.load %arg6[%c0_15, %c0_16] : memref<2x4xf32, #tpu.memory_space<vmem>>, vector<2x4xf32>
      tpu.vector_store %arg6[%c0_15, %c0_16], %15 {strides = array<i32>} : memref<2x4xf32, #tpu.memory_space<vmem>>, vector<2x4xf32>,
      %cst_17 = arith.constant 0xFF800000 : f32
      %17 = vector.broadcast %cst_17 : f32 to vector<2x4xf32>
      %c0_18 = arith.constant 0 : index
      %c0_19 = arith.constant 0 : index
      %18 = vector.load %arg7[%c0_18, %c0_19] : memref<2x4xf32, #tpu.memory_space<vmem>>, vector<2x4xf32>
      tpu.vector_store %arg7[%c0_18, %c0_19], %17 {strides = array<i32>} : memref<2x4xf32, #tpu.memory_space<vmem>>, vector<2x4xf32>,
    } else {
    }
    %c0 = arith.constant 0 : index
    %c0_1 = arith.constant 0 : index
    %c0_2 = arith.constant 0 : index
    %3 = vector.load %arg2[%c0, %c0_1, %c0_2] : memref<2x4x256xf32, #tpu.memory_space<vmem>>, vector<2x4x256xf32>
    %c0_3 = arith.constant 0 : index
    %c0_4 = arith.constant 0 : index
    %4 = vector.load %arg6[%c0_3, %c0_4] : memref<2x4xf32, #tpu.memory_space<vmem>>, vector<2x4xf32>
    %cst = arith.constant dense<0.000000e+00> : vector<2x4xf32>
    %5 = vector.multi_reduction <add>, %3, %cst [2] : vector<2x4x256xf32> to vector<2x4xf32>
    %6 = arith.addf %4, %5 : vector<2x4xf32>
    %c0_5 = arith.constant 0 : index
    %c0_6 = arith.constant 0 : index
    %7 = vector.load %arg6[%c0_5, %c0_6] : memref<2x4xf32, #tpu.memory_space<vmem>>, vector<2x4xf32>
    tpu.vector_store %arg6[%c0_5, %c0_6], %6 {strides = array<i32>} : memref<2x4xf32, #tpu.memory_space<vmem>>, vector<2x4xf32>,
    %c0_7 = arith.constant 0 : index
    %c0_8 = arith.constant 0 : index
    %8 = vector.load %arg7[%c0_7, %c0_8] : memref<2x4xf32, #tpu.memory_space<vmem>>, vector<2x4xf32>
    %cst_9 = arith.constant dense<0xFF800000> : vector<2x4xf32>
    %9 = vector.multi_reduction <maximumf>, %3, %cst_9 [2] : vector<2x4x256xf32> to vector<2x4xf32>
    %10 = arith.maximumf %8, %9 : vector<2x4xf32>
    %c0_10 = arith.constant 0 : index
    %c0_11 = arith.constant 0 : index
    %11 = vector.load %arg7[%c0_10, %c0_11] : memref<2x4xf32, #tpu.memory_space<vmem>>, vector<2x4xf32>
    tpu.vector_store %arg7[%c0_10, %c0_11], %10 {strides = array<i32>} : memref<2x4xf32, #tpu.memory_space<vmem>>, vector<2x4xf32>,
    %c0_i32_12 = arith.constant 0 : i32
    %12 = arith.cmpi eq, %arg1, %c0_i32_12 : i32
    %13 = arith.extui %12 : i1 to i32
    %c0_i32_13 = arith.constant 0 : i32
    %14 = arith.cmpi ne, %13, %c0_i32_13 : i32
    scf.if %14 {
      %c0_14 = arith.constant 0 : index
      %c0_15 = arith.constant 0 : index
      %15 = vector.load %arg6[%c0_14, %c0_15] : memref<2x4xf32, #tpu.memory_space<vmem>>, vector<2x4xf32>
      %cst_16 = arith.constant 3.906250e-03 : f32
      %16 = vector.broadcast %cst_16 : f32 to vector<2x4xf32>
      %17 = arith.mulf %15, %16 : vector<2x4xf32>
      %c0_17 = arith.constant 0 : index
      %c0_18 = arith.constant 0 : index
      %18 = vector.load %arg7[%c0_17, %c0_18] : memref<2x4xf32, #tpu.memory_space<vmem>>, vector<2x4xf32>
      %19 = tpu.concatenate %17, %18 in 0 : vector<2x4xf32>, vector<2x4xf32> -> vector<4x4xf32>
      %c0_19 = arith.constant 0 : index
      %c0_20 = arith.constant 0 : index
      %20 = vector.load %arg3[%c0_19, %c0_20] : memref<4x2xf32, #tpu.memory_space<vmem>>, vector<4x2xf32>
      %c0_21 = arith.constant 0 : index
      %c0_22 = arith.constant 0 : index
      %21 = vector.load %arg4[%c0_21, %c0_22] : memref<2x4xf32, #tpu.memory_space<vmem>>, vector<2x4xf32>
      %cst_23 = arith.constant dense<0.000000e+00> : vector<4x2xf32>
      %22 = tpu.matmul %19, %20, %cst_23 {dimension_numbers = #tpu.dot_dimension_numbers<[1], [0], [0], [1], [0, 0, 1, 1], [], []>} : vector<4x4xf32>, vector<4x2xf32>, vector<4x2xf32> -> vector<4x2xf32>
      %cst_24 = arith.constant 0.000000e+00 : f32
      %23 = vector.broadcast %cst_24 : f32 to vector<4x2xf32>
      %24 = arith.maximumf %22, %23 : vector<4x2xf32>
      %cst_25 = arith.constant dense<0.000000e+00> : vector<4x4xf32>
      %25 = tpu.matmul %24, %21, %cst_25 {dimension_numbers = #tpu.dot_dimension_numbers<[1], [0], [0], [1], [0, 0, 1, 1], [], []>} : vector<4x2xf32>, vector<2x4xf32>, vector<4x4xf32> -> vector<4x4xf32>
      %26 = vector.extract_strided_slice %25 {offsets = [0, 0], sizes = [2, 4], strides = [1, 1]} : vector<4x4xf32> to vector<2x4xf32>
      %27 = vector.extract_strided_slice %25 {offsets = [2, 0], sizes = [2, 4], strides = [1, 1]} : vector<4x4xf32> to vector<2x4xf32>
      %28 = arith.addf %26, %27 : vector<2x4xf32>
      %29 = arith.negf %28 : vector<2x4xf32>
      %30 = math.exp %29 : vector<2x4xf32>
      %cst_26 = arith.constant 1.000000e+00 : f32
      %31 = vector.broadcast %cst_26 : f32 to vector<2x4xf32>
      %32 = arith.addf %31, %30 : vector<2x4xf32>
      %33 = arith.divf %31, %32 : vector<2x4xf32>
      %c0_27 = arith.constant 0 : index
      %c0_28 = arith.constant 0 : index
      %34 = vector.load %arg5[%c0_27, %c0_28] : memref<2x4xf32, #tpu.memory_space<vmem>>, vector<2x4xf32>
      tpu.vector_store %arg5[%c0_27, %c0_28], %33 {strides = array<i32>} : memref<2x4xf32, #tpu.memory_space<vmem>>, vector<2x4xf32>,
    } else {
    }
    return
  }
  func.func @transform_0(%arg0: i32, %arg1: i32) -> (i32, i32, i32) {
    %c0_i32 = arith.constant 0 : i32
    %c0_i32_0 = arith.constant 0 : i32
    return %arg0, %c0_i32, %arg1 : i32, i32, i32
  }
  func.func @transform_1(%arg0: i32, %arg1: i32) -> (i32, i32) {
    %c0_i32 = arith.constant 0 : i32
    %c0_i32_0 = arith.constant 0 : i32
    %c0_i32_1 = arith.constant 0 : i32
    return %c0_i32, %c0_i32_0 : i32, i32
  }
  func.func @transform_2(%arg0: i32, %arg1: i32) -> (i32, i32) {
    %c0_i32 = arith.constant 0 : i32
    %c0_i32_0 = arith.constant 0 : i32
    %c0_i32_1 = arith.constant 0 : i32
    return %c0_i32, %c0_i32_0 : i32, i32
  }
  func.func @transform_3(%arg0: i32, %arg1: i32) -> (i32, i32) {
    %c0_i32 = arith.constant 0 : i32
    %c0_i32_0 = arith.constant 0 : i32
    return %arg0, %c0_i32 : i32, i32
  }
}

</mosaic_0001>

<llo_original>
// kernel: tpu_custom_call.1
$region0: #{tpu_custom_call.1}
  #allocation0 [shape = 'u32[]', space=smem, size = 0x4, offset = 0x4, fixed_abs, tag = 'smem constant byte address 0x4 - core index']
  #allocation1 [shape = 'u32[144,128]{1,0:T(1,128)}', space=vmem, size = 0x12000, scoped, tag = 'internal scratch']
  #allocation2 [shape = 'f32[2,4]{1,0:T(2,128)}', space=vmem, size = 0x400, scoped, tag = 'scratch operand']
  #allocation3 [shape = 'f32[2,4]{1,0:T(2,128)}', space=vmem, size = 0x400, scoped, tag = 'scratch operand']
  %s0 = inlined_call_operand.hbm [shape: f32[2,4,256], index: 0, kind: input, shape index: {}]
  %s1 = inlined_call_operand.vmem [shape: f32[4,2], index: 1, kind: input, shape index: {}]
  %s2 = inlined_call_operand.vmem [shape: f32[2,4], index: 2, kind: input, shape index: {}]
  %s3 = inlined_call_operand.hbm [shape: f32[2,4], index: 3, kind: output, shape index: {}]
  %s4 = sld [smem:[#allocation0]]
  $region34: #{tpu_custom_call.1} parent=0
    _
  %s6 = ssub.s32 1, %s4
  %s7 = scalar_select 0, %s6, %s4
  $region1: #{tpu_custom_call.1} parent=0
    #allocation4 [shape = 'u8[8192]{0}', space=vmem, size = 0x2000, scoped, tag = 'input window, operand 0, single buffered']
    #allocation5 [shape = 's32[1]{0}', space=sflag, size = 0x4, scoped, tag = 'scoped memory for tpu_custom_call.1']
    #allocation6 [shape = 's32[1]{0}', space=sflag, size = 0x4, scoped, tag = 'scoped memory for tpu_custom_call.1']
    #allocation7 [shape = 'u8[1024]{0}', space=vmem, size = 0x400, scoped, tag = 'output window, operand 0, single buffered']
    %8 = vsyncpa [#allocation5], 0
    %9 = vsyncpa [#allocation6], 0
    // Predicated region
    $region2: #{tpu_custom_call.1} parent=1 // pred_check
      _
    $region3: #{tpu_custom_call.1} parent=1 // pred_check_branch
      %11 = sbr.rel (0) target = $region5
    $region4: #{tpu_custom_call.1} parent=1 // pred_region
      %s13 = ssub.s32 256, 256
      %14 = vsyncadd [#allocation5], %s13
      %s15 = sshll.u32 [#allocation4], 4
      %s16 = int_to_ptr.vmem [resolvable:$true] %s15
      %21 = dma.hbm_to_vmem [thread:$0]  %s0, 256, %s16, [#allocation5], 128, 128, 8
    $region5: #{tpu_custom_call.1} parent=1 // pred_fallthru
      _
    // Predicated region
    $region6: #{tpu_custom_call.1} parent=1 // pred_check
      _
    $region7: #{tpu_custom_call.1} parent=1 // pred_check_branch
      %23 = sbr.rel (0) target = $region9
    $region8: #{tpu_custom_call.1} parent=1 // pred_region
      _
    $region9: #{tpu_custom_call.1} parent=1 // pred_fallthru
      _
    // Predicated region
    $region10: #{tpu_custom_call.1} parent=1 // pred_check
      _
    $region11: #{tpu_custom_call.1} parent=1 // pred_check_branch
      %25 = sbr.rel (0) target = $region13
    $region12: #{tpu_custom_call.1} parent=1 // pred_region
      _
    $region13: #{tpu_custom_call.1} parent=1 // pred_fallthru
      _
    // Predicated region
    $region14: #{tpu_custom_call.1} parent=1 // pred_check
      _
    $region15: #{tpu_custom_call.1} parent=1 // pred_check_branch
      %27 = sbr.rel (0) target = $region17
    $region16: #{tpu_custom_call.1} parent=1 // pred_region
      %28 = dma.done [#allocation5], 256
    $region17: #{tpu_custom_call.1} parent=1 // pred_fallthru
      _
    %p29 = scmp.eq.s32.totalorder 0, 0
    // Predicated region
    $region18: #{tpu_custom_call.1} parent=1 // pred_check
      %p30 = pneg %p29
    $region19: #{tpu_custom_call.1} parent=1 // pred_check_branch
      %32 = sbr.rel (%p30) target = $region21
    $region20: #{tpu_custom_call.1} parent=1 // pred_region
      %vm33 = vcmask 25600
      %34 = vst.msk [vmem:[#allocation2] sm:$0x3] %vm33, 0.0
      %35 = vst.msk [vmem:[#allocation3] sm:$0x3] %vm33, -inf
    $region21: #{tpu_custom_call.1} parent=1 // pred_fallthru
      _
    %v36 = vld [vmem:[#allocation4] sm:$0xff]
    %v37 = vld [vmem:[#allocation4 + $0x8] sm:$0xff]
    %v38 = vld [vmem:[#allocation2] sm:$0x3]
    %v41 = vcombine.high %v36, %v36
    %v42 = vcombine.high %v37, %v37
    %vm45 = vcmask 1043456
    %v46 = vsel %vm45, %v36, 0.0
    %v47 = vsel %vm45, %v41, 0.0
    %v48 = vadd.f32 %v46, %v47
    %49 = vadd.xlane.f32.xlu0 %v48
    %v50 = vpop.xlane.xlu0 %49
    %v51 = vsel %vm45, %v37, 0.0
    %v52 = vsel %vm45, %v42, 0.0
    %v53 = vadd.f32 %v51, %v52
    %54 = vadd.xlane.f32.xlu0 %v53
    %v55 = vpop.xlane.xlu0 %54
    %v58 = vlaneseq
    %v59 = vand.u32 %v58, 127
    %v60 = vlaneseq
    %v61 = vshrl.u32 %v60, 7
    %v62 = vsub.s32 %v59, %v61
    %v63 = vrot.slane %v50, %v62
    %v64 = vlaneseq
    %v65 = vshrl.u32 %v64, 7
    %v66 = vsub.s32 %v59, %v65
    %v67 = vrot.slane %v55, %v66
    %vm68 = vcmask 1041409
    %v69 = vsel %vm68, %v67, %v63
    %v71 = vadd.f32 %v38, %v69
    %vm72 = vcmask 25600
    %73 = vst.msk [vmem:[#allocation2] sm:$0x3] %vm72, %v71
    %v74 = vld [vmem:[#allocation3] sm:$0x3]
    %v75 = vsel %vm45, %v36, -inf
    %v76 = vsel %vm45, %v41, -inf
    %v77 = vmax.f32 %v75, %v76
    %78 = vmax.xlane.f32.xlu0 %v77
    %v79 = vpop.xlane.xlu0 %78
    %v80 = vsel %vm45, %v37, -inf
    %v81 = vsel %vm45, %v42, -inf
    %v82 = vmax.f32 %v80, %v81
    %83 = vmax.xlane.f32.xlu0 %v82
    %v84 = vpop.xlane.xlu0 %83
    %v87 = vlaneseq
    %v88 = vshrl.u32 %v87, 7
    %v89 = vsub.s32 %v59, %v88
    %v90 = vrot.slane %v79, %v89
    %v91 = vlaneseq
    %v92 = vshrl.u32 %v91, 7
    %v93 = vsub.s32 %v59, %v92
    %v94 = vrot.slane %v84, %v93
    %v95 = vsel %vm68, %v94, %v90
    %v97 = vmax.f32 %v74, %v95
    %98 = vst.msk [vmem:[#allocation3] sm:$0x3] %vm72, %v97
    // Predicated region
    $region22: #{tpu_custom_call.1} parent=1 // pred_check
      %p99 = pneg %p29
    $region23: #{tpu_custom_call.1} parent=1 // pred_check_branch
      %101 = sbr.rel (%p99) target = $region25
    $region24: #{tpu_custom_call.1} parent=1 // pred_region
      %v102 = vld [vmem:[#allocation2] sm:$0x3]
      %v103 = vmul.f32 %v102, 0.00390625
      %v104 = vld [vmem:[#allocation3] sm:$0x3]
      %v106 = vrot.slane %v104, 6
      %vm108 = vcmask 1041408
      %v109 = vsel %vm108, %v103, %v106
      %v110 = vld [vmem:[%s1] sm:$0xf]
      %v111 = vld [vmem:[%s2] sm:$0x3]
      %vm112 = vcmask 31744
      %v114 = vsel %vm112, %v109, 0
      %v117 = vsel %vm45, %v110, 0
      %119 = vmatprep.subr.mxu0 0.0
      %120 = vmatpush1.msra.mxu0 %v117
      %121 = vmatprep.subr.mxu0 0.0
      %122 = vmatpush1.msra.mxu0 0.0
      %123 = vmatprep.subr.mxu0 0.0
      %124 = vmatpush1.msra.mxu0 0.0
      %125 = vmatprep.subr.mxu0 0.0
      %126 = vmatpush1.msra.mxu0 0.0
      %127 = vmatprep.subr.mxu0 0.0
      %128 = vmatpush1.msra.mxu0 0.0
      %129 = vmatprep.subr.mxu0 0.0
      %130 = vmatpush1.msra.mxu0 0.0
      %131 = vmatprep.subr.mxu0 0.0
      %132 = vmatpush1.msra.mxu0 0.0
      %133 = vmatprep.subr.mxu0 0.0
      %134 = vmatpush1.msra.mxu0 0.0
      %135 = vmatprep.subr.mxu0 0.0
      %136 = vmatpush1.msra.mxu0 0.0
      %137 = vmatprep.subr.mxu0 0.0
      %138 = vmatpush1.msra.mxu0 0.0
      %139 = vmatprep.subr.mxu0 0.0
      %140 = vmatpush1.msra.mxu0 0.0
      %141 = vmatprep.subr.mxu0 0.0
      %142 = vmatpush1.msra.mxu0 0.0
      %143 = vmatprep.subr.mxu0 0.0
      %144 = vmatpush1.msra.mxu0 0.0
      %145 = vmatprep.subr.mxu0 0.0
      %146 = vmatpush1.msra.mxu0 0.0
      %147 = vmatprep.subr.mxu0 0.0
      %148 = vmatpush1.msra.mxu0 0.0
      %149 = vmatprep.subr.mxu0 0.0
      %150 = vmatpush1.msra.mxu0 0.0
      %151 = vmatprep.subr.mxu0 0.0
      %152 = vmatpush1.msra.mxu0 0.0
      %153 = vmatprep.subr.mxu0 0.0
      %154 = vmatpush1.msra.mxu0 0.0
      %155 = vmatprep.subr.mxu0 0.0
      %156 = vmatpush1.msra.mxu0 0.0
      %157 = vmatprep.subr.mxu0 0.0
      %158 = vmatpush1.msra.mxu0 0.0
      %159 = vmatprep.subr.mxu0 0.0
      %160 = vmatpush1.msra.mxu0 0.0
      %161 = vmatprep.subr.mxu0 0.0
      %162 = vmatpush1.msra.mxu0 0.0
      %163 = vmatprep.subr.mxu0 0.0
      %164 = vmatpush1.msra.mxu0 0.0
      %165 = vmatprep.subr.mxu0 0.0
      %166 = vmatpush1.msra.mxu0 0.0
      %167 = vmatprep.subr.mxu0 0.0
      %168 = vmatpush1.msra.mxu0 0.0
      %169 = vmatprep.subr.mxu0 0.0
      %170 = vmatpush1.msra.mxu0 0.0
      %171 = vmatprep.subr.mxu0 0.0
      %172 = vmatpush1.msra.mxu0 0.0
      %173 = vmatprep.subr.mxu0 0.0
      %174 = vmatpush1.msra.mxu0 0.0
      %175 = vmatprep.subr.mxu0 0.0
      %176 = vmatpush1.msra.mxu0 0.0
      %177 = vmatprep.subr.mxu0 0.0
      %178 = vmatpush1.msra.mxu0 0.0
      %179 = vmatprep.subr.mxu0 0.0
      %180 = vmatpush1.msra.mxu0 0.0
      %181 = vmatprep.subr.mxu0 0.0
      %182 = vmatpush1.msra.mxu0 0.0
      %183 = vmatprep.mubr.f32.mxu0 0.0
      %184 = vmatmul.mubr.f32.gmra.mrb[0].mxu0 %v114
      %v185 = vpop.f32.mrb[0].mxu0
      %v186 = vadd.f32 0.0, %v185
      %v187 = vpop.f32.mrb[0].mxu0
      %188 = vdwg.mxu0
      %v189 = vmax.f32 %v186, 0.0
      %vm190 = vcmask 15360
      %v192 = vsel %vm190, %v189, 0
      %v195 = vsel %vm108, %v111, 0
      %197 = vmatprep.subr.mxu0 0.0
      %198 = vmatpush1.msra.mxu0 %v195
      %199 = vmatprep.subr.mxu0 0.0
      %200 = vmatpush1.msra.mxu0 0.0
      %201 = vmatprep.subr.mxu0 0.0
      %202 = vmatpush1.msra.mxu0 0.0
      %203 = vmatprep.subr.mxu0 0.0
      %204 = vmatpush1.msra.mxu0 0.0
      %205 = vmatprep.subr.mxu0 0.0
      %206 = vmatpush1.msra.mxu0 0.0
      %207 = vmatprep.subr.mxu0 0.0
      %208 = vmatpush1.msra.mxu0 0.0
      %209 = vmatprep.subr.mxu0 0.0
      %210 = vmatpush1.msra.mxu0 0.0
      %211 = vmatprep.subr.mxu0 0.0
      %212 = vmatpush1.msra.mxu0 0.0
      %213 = vmatprep.subr.mxu0 0.0
      %214 = vmatpush1.msra.mxu0 0.0
      %215 = vmatprep.subr.mxu0 0.0
      %216 = vmatpush1.msra.mxu0 0.0
      %217 = vmatprep.subr.mxu0 0.0
      %218 = vmatpush1.msra.mxu0 0.0
      %219 = vmatprep.subr.mxu0 0.0
      %220 = vmatpush1.msra.mxu0 0.0
      %221 = vmatprep.subr.mxu0 0.0
      %222 = vmatpush1.msra.mxu0 0.0
      %223 = vmatprep.subr.mxu0 0.0
      %224 = vmatpush1.msra.mxu0 0.0
      %225 = vmatprep.subr.mxu0 0.0
      %226 = vmatpush1.msra.mxu0 0.0
      %227 = vmatprep.subr.mxu0 0.0
      %228 = vmatpush1.msra.mxu0 0.0
      %229 = vmatprep.subr.mxu0 0.0
      %230 = vmatpush1.msra.mxu0 0.0
      %231 = vmatprep.subr.mxu0 0.0
      %232 = vmatpush1.msra.mxu0 0.0
      %233 = vmatprep.subr.mxu0 0.0
      %234 = vmatpush1.msra.mxu0 0.0
      %235 = vmatprep.subr.mxu0 0.0
      %236 = vmatpush1.msra.mxu0 0.0
      %237 = vmatprep.subr.mxu0 0.0
      %238 = vmatpush1.msra.mxu0 0.0
      %239 = vmatprep.subr.mxu0 0.0
      %240 = vmatpush1.msra.mxu0 0.0
      %241 = vmatprep.subr.mxu0 0.0
      %242 = vmatpush1.msra.mxu0 0.0
      %243 = vmatprep.subr.mxu0 0.0
      %244 = vmatpush1.msra.mxu0 0.0
      %245 = vmatprep.subr.mxu0 0.0
      %246 = vmatpush1.msra.mxu0 0.0
      %247 = vmatprep.subr.mxu0 0.0
      %248 = vmatpush1.msra.mxu0 0.0
      %249 = vmatprep.subr.mxu0 0.0
      %250 = vmatpush1.msra.mxu0 0.0
      %251 = vmatprep.subr.mxu0 0.0
      %252 = vmatpush1.msra.mxu0 0.0
      %253 = vmatprep.subr.mxu0 0.0
      %254 = vmatpush1.msra.mxu0 0.0
      %255 = vmatprep.subr.mxu0 0.0
      %256 = vmatpush1.msra.mxu0 0.0
      %257 = vmatprep.subr.mxu0 0.0
      %258 = vmatpush1.msra.mxu0 0.0
      %259 = vmatprep.subr.mxu0 0.0
      %260 = vmatpush1.msra.mxu0 0.0
      %261 = vmatprep.mubr.f32.mxu0 0.0
      %262 = vmatmul.mubr.f32.gmra.mrb[0].mxu0 %v192
      %v263 = vpop.f32.mrb[0].mxu0
      %v264 = vadd.f32 0.0, %v263
      %v265 = vpop.f32.mrb[0].mxu0
      %266 = vdwg.mxu0
      %v268 = vrot.slane %v264, 2
      %v270 = vadd.f32 %v264, %v268
      %v271 = vxor.u32 %v270, 2147483648
      %v272 = vmul.f32 %v271, 1.442695
      %v273 = vpow.pop %v272
      %v274 = vadd.f32 %v273, 1.0
      %v275 = vrcp.pop %v274
      %v276 = vmul.f32 1.0, %v275
      %277 = vst.msk [vmem:[#allocation7] sm:$0x3] %vm72, %v276
    $region25: #{tpu_custom_call.1} parent=1 // pred_fallthru
      _
    // Predicated region
    $region26: #{tpu_custom_call.1} parent=1 // pred_check
      _
    $region27: #{tpu_custom_call.1} parent=1 // pred_check_branch
      %279 = sbr.rel (0) target = $region29
    $region28: #{tpu_custom_call.1} parent=1 // pred_region
      %s281 = ssub.s32 32, 32
      %282 = vsyncadd [#allocation6], %s281
      %s284 = sshll.u32 [#allocation7], 4
      %s285 = int_to_ptr.vmem [resolvable:$true] %s284
      %287 = dma.vmem_to_hbm [thread:$0]  %s285, 32, %s3, [#allocation6]
    $region29: #{tpu_custom_call.1} parent=1 // pred_fallthru
      _
    // Predicated region
    $region30: #{tpu_custom_call.1} parent=1 // pred_check
      _
    $region31: #{tpu_custom_call.1} parent=1 // pred_check_branch
      %289 = sbr.rel (0) target = $region33
    $region32: #{tpu_custom_call.1} parent=1 // pred_region
      %290 = dma.done [#allocation6], 32
    $region33: #{tpu_custom_call.1} parent=1 // pred_fallthru
      _
    %291 = vsyncpa [#allocation5], 1
    %292 = vsyncpa [#allocation6], 1

</llo_original>
